<compile_context>
chip_gen: v7x
topology: tpu7x:2x2x1
jax: 0.10.0
libtpu: 0.0.40
codegen_flags: <defaults>
</compile_context>

<pallas_src>
import jax
import jax.numpy as jnp
from jax.experimental import pallas as pl
from jax.experimental.pallas import tpu as pltpu


def _weight_learner_kernel(q_ref, tail_ref, w1q_ref, w1t_ref, b1_ref,
                           w2p_ref, b2p_ref, o_ref):
    """q: (1,E) f32, tail: (TT,E) f32, w1q/w1t: (E,H), b1: (1,H) f32,
    w2p: (H,2), b2p: (1,2) f32  ->  o: (TT,2) f32 (softmax probabilities)."""
    mdt = w1q_ref.dtype            # matmul operand dtype (bf16 by default)
    f32 = jnp.float32

    # First Linear, split across the concat: h = [query | tail] @ W1 + b1
    hq = jnp.dot(q_ref[...].astype(mdt), w1q_ref[...],
                 preferred_element_type=f32)                      # (1, H)
    ht = jnp.dot(tail_ref[...].astype(mdt), w1t_ref[...],
                 preferred_element_type=f32)                      # (TT, H)
    h = ht + hq + b1_ref[...]                                     # broadcast (1,H)

    # LeakyReLU (torch default negative_slope = 0.01), f32 on the VPU
    h = jnp.where(h > 0.0, h, 0.01 * h)

    # Second Linear folded into the +/- logit difference; elementwise sigmoid
    # of [d, -d] == softmax over the 2 classes.  exp + vrcp live on the EUP.
    logits = jnp.dot(h.astype(mdt), w2p_ref[...],
                     preferred_element_type=f32) + b2p_ref[...]   # (TT, 2)
    probs = pl.reciprocal(1.0 + jnp.exp(-logits), approx=True)
    o_ref[...] = probs.astype(o_ref.dtype)


def _pick_tail_tile(T: int) -> int:
    """Tail-candidate tile size: big tiles amortize the ~0.35us/step overhead."""
    if T <= 512:
        return T
    for tt in (512, 384, 256, 128, 64, 32, 16, 8):
        if T % tt == 0:
            return tt
    return T  # fallback: single block over T


def weight_learner_forward(query, tail, params, *, matmul_dtype=jnp.bfloat16):
    """query: (B, 1, E) f32, tail: (B, T, E) f32 -> softmax weights (B, T, 2) f32."""
    w1, b1, w2, b2 = params["w1"], params["b1"], params["w2"], params["b2"]
    B, one, E = query.shape
    assert one == 1
    Bt, T, Et = tail.shape
    assert Bt == B and Et == E
    in_dim, H = w1.shape
    assert in_dim == 2 * E and w2.shape == (H, 2)

    # Split W1 along the concat axis (cat([q, tail]) @ W1 == q @ W1[:E] + tail @ W1[E:]).
    w1q = w1[:E].astype(matmul_dtype)                  # (E, H)
    w1t = w1[E:].astype(matmul_dtype)                  # (E, H)
    b1r = b1.reshape(1, H).astype(jnp.float32)

    # 2-way softmax == sigmoid of the +/- logit difference.
    w2d = w2[:, 0:1] - w2[:, 1:2]                      # (H, 1)
    w2p = jnp.concatenate([w2d, -w2d], axis=1).astype(matmul_dtype)   # (H, 2)
    b2d = (b2[0] - b2[1]).reshape(1, 1)
    b2p = jnp.concatenate([b2d, -b2d], axis=1).astype(jnp.float32)    # (1, 2)

    TT = _pick_tail_tile(T)
    grid = (B, pl.cdiv(T, TT))

    flops = 2 * B * T * E * H + 2 * B * E * H + 4 * B * T * H
    bytes_accessed = (query.size * 4 + tail.size * 4
                      + (2 * E * H + 2 * H) * 2 + H * 4 + 8
                      + B * T * 2 * 4)

    out = pl.pallas_call(
        _weight_learner_kernel,
        out_shape=jax.ShapeDtypeStruct((B, T, 2), jnp.float32),
        grid=grid,
        in_specs=[
            pl.BlockSpec((None, 1, E), lambda b, t: (b, 0, 0)),    # query row (per batch)
            pl.BlockSpec((None, TT, E), lambda b, t: (b, t, 0)),   # tail tile (pipelined)
            pl.BlockSpec((E, H), lambda b, t: (0, 0)),             # W1[:E]   (resident)
            pl.BlockSpec((E, H), lambda b, t: (0, 0)),             # W1[E:]   (resident)
            pl.BlockSpec((1, H), lambda b, t: (0, 0)),             # b1
            pl.BlockSpec((H, 2), lambda b, t: (0, 0)),             # +/- logit-diff weights
            pl.BlockSpec((1, 2), lambda b, t: (0, 0)),             # +/- logit-diff bias
        ],
        out_specs=pl.BlockSpec((None, TT, 2), lambda b, t: (b, t, 0)),
        compiler_params=pltpu.CompilerParams(
            dimension_semantics=("parallel", "parallel")),
        cost_estimate=pl.CostEstimate(
            flops=int(flops),
            transcendentals=int(2 * B * T),
            bytes_accessed=int(bytes_accessed)),
    )(query, tail, w1q, w1t, b1r, w2p, b2p)
    return out


def init_params(key, entity_dim, layer_mul=2):
    """Torch nn.Linear default (uniform +/- 1/sqrt(fan_in)); weights stored (in, out)."""
    in_dim = 2 * entity_dim
    hidden = in_dim * layer_mul
    k1, k2, k3, k4 = jax.random.split(key, 4)
    lim1 = 1.0 / (in_dim ** 0.5)
    lim2 = 1.0 / (hidden ** 0.5)
    w1 = jax.random.uniform(k1, (in_dim, hidden), jnp.float32, -lim1, lim1)
    b1 = jax.random.uniform(k2, (hidden,), jnp.float32, -lim1, lim1)
    w2 = jax.random.uniform(k3, (hidden, 2), jnp.float32, -lim2, lim2)
    b2 = jax.random.uniform(k4, (2,), jnp.float32, -lim2, lim2)
    return {"w1": w1, "b1": b1, "w2": w2, "b2": b2}


if __name__ == "__main__":
    # Small config consistent with the module: entity_dim = target_dim * entity_mul
    target_dim, entity_mul = 16, 2
    E = target_dim * entity_mul      # 32
    H = (E + E) * 2                  # 128 (hidden)
    B, T = 2, 8                      # batch, number of tail candidates

    key = jax.random.PRNGKey(0)
    kq, kt, kp = jax.random.split(key, 3)
    query = jax.random.normal(kq, (B, 1, E), jnp.float32)
    tail = jax.random.normal(kt, (B, T, E), jnp.float32)
    params = init_params(kp, E)

    out = weight_learner_forward(query, tail, params)
    out = jax.block_until_ready(out)
    assert out.shape == (B, T, 2)

    # --- Reference 1: exact module semantics in f32 (concat + MLP + softmax) ---
    qe = jnp.broadcast_to(query, (B, T, E))
    comb = jnp.concatenate([qe, tail], axis=2)                     # (B, T, 2E)
    h = comb @ params["w1"] + params["b1"]
    h = jnp.where(h > 0, h, 0.01 * h)
    logits = h @ params["w2"] + params["b2"]
    ref_exact = jax.nn.softmax(logits, axis=-1)
    assert jnp.allclose(out, ref_exact, atol=2e-2), "mismatch vs f32 module reference"

    # --- Reference 2: precision-matched (bf16 MXU operands, f32 accumulate) ---
    bf = jnp.bfloat16
    h_m = jnp.dot(comb.astype(bf), params["w1"].astype(bf),
                  preferred_element_type=jnp.float32) + params["b1"]
    h_m = jnp.where(h_m > 0, h_m, 0.01 * h_m)
    w2d = params["w2"][:, 0:1] - params["w2"][:, 1:2]
    w2p = jnp.concatenate([w2d, -w2d], axis=1).astype(bf)
    b2d = params["b2"][0] - params["b2"][1]
    b2p = jnp.stack([b2d, -b2d])
    lg = jnp.dot(h_m.astype(bf), w2p, preferred_element_type=jnp.float32) + b2p
    ref_matched = jax.nn.sigmoid(lg)
    assert jnp.allclose(out, ref_matched, atol=5e-3), "mismatch vs precision-matched ref"

    print("KERNEL_OK")
</pallas_src>

<mosaic_0001>
module attributes {stable_mosaic.version = 11 : i64} {
  func.func @_weight_learner_kernel(%arg0: i32, %arg1: i32, %arg2: memref<1x1x32xf32, #tpu.memory_space<vmem>>, %arg3: memref<1x8x32xf32, #tpu.memory_space<vmem>>, %arg4: memref<32x128xbf16, #tpu.memory_space<vmem>>, %arg5: memref<32x128xbf16, #tpu.memory_space<vmem>>, %arg6: memref<1x128xf32, #tpu.memory_space<vmem>>, %arg7: memref<128x2xbf16, #tpu.memory_space<vmem>>, %arg8: memref<1x2xf32, #tpu.memory_space<vmem>>, %arg9: memref<1x8x2xf32, #tpu.memory_space<vmem>>) attributes {dimension_semantics = [#tpu.dimension_semantics<parallel>, #tpu.dimension_semantics<parallel>], iteration_bounds = array<i64: 2, 1>, scalar_prefetch = 0 : i64, scratch_operands = 0 : i64, tpu.core_type = #tpu.core_type<tc>, window_params = [{transform_indices = @transform_0, window_bounds = array<i64: 1, 1, 32>}, {transform_indices = @transform_1, window_bounds = array<i64: 1, 8, 32>}, {pipeline_mode = #tpu.pipeline_mode<synchronous>, transform_indices = @transform_2, window_bounds = array<i64: 32, 128>}, {pipeline_mode = #tpu.pipeline_mode<synchronous>, transform_indices = @transform_3, window_bounds = array<i64: 32, 128>}, {pipeline_mode = #tpu.pipeline_mode<synchronous>, transform_indices = @transform_4, window_bounds = array<i64: 1, 128>}, {pipeline_mode = #tpu.pipeline_mode<synchronous>, transform_indices = @transform_5, window_bounds = array<i64: 128, 2>}, {pipeline_mode = #tpu.pipeline_mode<synchronous>, transform_indices = @transform_6, window_bounds = array<i64: 1, 2>}, {transform_indices = @transform_7, window_bounds = array<i64: 1, 8, 2>}]} {
    %c0 = arith.constant 0 : index
    %c0_0 = arith.constant 0 : index
    %c0_1 = arith.constant 0 : index
    %0 = vector.load %arg2[%c0, %c0_0, %c0_1] : memref<1x1x32xf32, #tpu.memory_space<vmem>>, vector<1x1x32xf32>
    %1 = vector.shape_cast %0 : vector<1x1x32xf32> to vector<1x32xf32>
    %2 = arith.truncf %1 : vector<1x32xf32> to vector<1x32xbf16>
    %c0_2 = arith.constant 0 : index
    %c0_3 = arith.constant 0 : index
    %3 = vector.load %arg4[%c0_2, %c0_3] : memref<32x128xbf16, #tpu.memory_space<vmem>>, vector<32x128xbf16>
    %cst = arith.constant dense<0.000000e+00> : vector<1x128xf32>
    %4 = tpu.matmul %2, %3, %cst {dimension_numbers = #tpu.dot_dimension_numbers<[1], [0], [0], [1], [0, 0, 1, 1], [], []>} : vector<1x32xbf16>, vector<32x128xbf16>, vector<1x128xf32> -> vector<1x128xf32>
    %c0_4 = arith.constant 0 : index
    %c0_5 = arith.constant 0 : index
    %c0_6 = arith.constant 0 : index
    %5 = vector.load %arg3[%c0_4, %c0_5, %c0_6] : memref<1x8x32xf32, #tpu.memory_space<vmem>>, vector<1x8x32xf32>
    %6 = vector.shape_cast %5 : vector<1x8x32xf32> to vector<8x32xf32>
    %7 = arith.truncf %6 : vector<8x32xf32> to vector<8x32xbf16>
    %c0_7 = arith.constant 0 : index
    %c0_8 = arith.constant 0 : index
    %8 = vector.load %arg5[%c0_7, %c0_8] : memref<32x128xbf16, #tpu.memory_space<vmem>>, vector<32x128xbf16>
    %cst_9 = arith.constant dense<0.000000e+00> : vector<8x128xf32>
    %9 = tpu.matmul %7, %8, %cst_9 {dimension_numbers = #tpu.dot_dimension_numbers<[1], [0], [0], [1], [0, 0, 1, 1], [], []>} : vector<8x32xbf16>, vector<32x128xbf16>, vector<8x128xf32> -> vector<8x128xf32>
    %10 = vector.broadcast %4 : vector<1x128xf32> to vector<8x128xf32>
    %11 = arith.addf %9, %10 : vector<8x128xf32>
    %c0_10 = arith.constant 0 : index
    %c0_11 = arith.constant 0 : index
    %12 = vector.load %arg6[%c0_10, %c0_11] : memref<1x128xf32, #tpu.memory_space<vmem>>, vector<1x128xf32>
    %13 = vector.broadcast %12 : vector<1x128xf32> to vector<8x128xf32>
    %14 = arith.addf %11, %13 : vector<8x128xf32>
    %cst_12 = arith.constant 0.000000e+00 : f32
    %15 = vector.broadcast %cst_12 : f32 to vector<8x128xf32>
    %16 = arith.cmpf ogt, %14, %15 : vector<8x128xf32>
    %cst_13 = arith.constant 0.00999999977 : f32
    %17 = vector.broadcast %cst_13 : f32 to vector<8x128xf32>
    %18 = arith.mulf %17, %14 : vector<8x128xf32>
    %19 = arith.select %16, %14, %18 : vector<8x128xi1>, vector<8x128xf32>
    %20 = arith.truncf %19 : vector<8x128xf32> to vector<8x128xbf16>
    %c0_14 = arith.constant 0 : index
    %c0_15 = arith.constant 0 : index
    %21 = vector.load %arg7[%c0_14, %c0_15] : memref<128x2xbf16, #tpu.memory_space<vmem>>, vector<128x2xbf16>
    %cst_16 = arith.constant dense<0.000000e+00> : vector<8x2xf32>
    %22 = tpu.matmul %20, %21, %cst_16 {dimension_numbers = #tpu.dot_dimension_numbers<[1], [0], [0], [1], [0, 0, 1, 1], [], []>} : vector<8x128xbf16>, vector<128x2xbf16>, vector<8x2xf32> -> vector<8x2xf32>
    %c0_17 = arith.constant 0 : index
    %c0_18 = arith.constant 0 : index
    %23 = vector.load %arg8[%c0_17, %c0_18] : memref<1x2xf32, #tpu.memory_space<vmem>>, vector<1x2xf32>
    %24 = vector.broadcast %23 : vector<1x2xf32> to vector<8x2xf32>
    %25 = arith.addf %22, %24 : vector<8x2xf32>
    %cst_19 = arith.constant 0.000000e+00 : f32
    %26 = vector.broadcast %cst_19 : f32 to vector<8x2xf32>
    %27 = arith.subf %26, %25 : vector<8x2xf32>
    %28 = math.exp %27 : vector<8x2xf32>
    %cst_20 = arith.constant 1.000000e+00 : f32
    %29 = vector.broadcast %cst_20 : f32 to vector<8x2xf32>
    %30 = arith.addf %29, %28 : vector<8x2xf32>
    %31 = tpu.reciprocal %30 {approx = true} : vector<8x2xf32> -> vector<8x2xf32>
    %c0_21 = arith.constant 0 : index
    %c0_22 = arith.constant 0 : index
    %c0_23 = arith.constant 0 : index
    %32 = vector.load %arg9[%c0_21, %c0_22, %c0_23] : memref<1x8x2xf32, #tpu.memory_space<vmem>>, vector<1x8x2xf32>
    %33 = vector.shape_cast %32 : vector<1x8x2xf32> to vector<8x2xf32>
    %34 = vector.shape_cast %31 : vector<8x2xf32> to vector<1x8x2xf32>
    tpu.vector_store %arg9[%c0_21, %c0_22, %c0_23], %34 {strides = array<i32>} : memref<1x8x2xf32, #tpu.memory_space<vmem>>, vector<1x8x2xf32>,
    return
  }
  func.func @transform_0(%arg0: i32, %arg1: i32) -> (i32, i32, i32) {
    %c0_i32 = arith.constant 0 : i32
    %c0_i32_0 = arith.constant 0 : i32
    %c0_i32_1 = arith.constant 0 : i32
    return %arg0, %c0_i32, %c0_i32_0 : i32, i32, i32
  }
  func.func @transform_1(%arg0: i32, %arg1: i32) -> (i32, i32, i32) {
    %c0_i32 = arith.constant 0 : i32
    %c0_i32_0 = arith.constant 0 : i32
    return %arg0, %arg1, %c0_i32 : i32, i32, i32
  }
  func.func @transform_2(%arg0: i32, %arg1: i32) -> (i32, i32) {
    %c0_i32 = arith.constant 0 : i32
    %c0_i32_0 = arith.constant 0 : i32
    %c0_i32_1 = arith.constant 0 : i32
    return %c0_i32, %c0_i32_0 : i32, i32
  }
  func.func @transform_3(%arg0: i32, %arg1: i32) -> (i32, i32) {
    %c0_i32 = arith.constant 0 : i32
    %c0_i32_0 = arith.constant 0 : i32
    %c0_i32_1 = arith.constant 0 : i32
    return %c0_i32, %c0_i32_0 : i32, i32
  }
  func.func @transform_4(%arg0: i32, %arg1: i32) -> (i32, i32) {
    %c0_i32 = arith.constant 0 : i32
    %c0_i32_0 = arith.constant 0 : i32
    %c0_i32_1 = arith.constant 0 : i32
    return %c0_i32, %c0_i32_0 : i32, i32
  }
  func.func @transform_5(%arg0: i32, %arg1: i32) -> (i32, i32) {
    %c0_i32 = arith.constant 0 : i32
    %c0_i32_0 = arith.constant 0 : i32
    %c0_i32_1 = arith.constant 0 : i32
    return %c0_i32, %c0_i32_0 : i32, i32
  }
  func.func @transform_6(%arg0: i32, %arg1: i32) -> (i32, i32) {
    %c0_i32 = arith.constant 0 : i32
    %c0_i32_0 = arith.constant 0 : i32
    %c0_i32_1 = arith.constant 0 : i32
    return %c0_i32, %c0_i32_0 : i32, i32
  }
  func.func @transform_7(%arg0: i32, %arg1: i32) -> (i32, i32, i32) {
    %c0_i32 = arith.constant 0 : i32
    %c0_i32_0 = arith.constant 0 : i32
    return %arg0, %arg1, %c0_i32 : i32, i32, i32
  }
}

</mosaic_0001>

<llo_original>
// kernel: tpu_custom_call.1
$region0: #{tpu_custom_call.1}
  #allocation0 [shape = 'u32[]', space=smem, size = 0x4, offset = 0x4, fixed_abs, tag = 'smem constant byte address 0x4 - core index']
  #allocation1 [shape = 'u32[144,128]{1,0:T(1,128)}', space=vmem, size = 0x12000, scoped, tag = 'internal scratch']
  %s0 = inlined_call_operand.vmem [shape: f32[2,1,32], index: 0, kind: input, shape index: {}]
  %s1 = inlined_call_operand.vmem [shape: f32[2,8,32], index: 1, kind: input, shape index: {}]
  %s2 = inlined_call_operand.vmem [shape: bf16[32,128], index: 2, kind: input, shape index: {}]
  %s3 = inlined_call_operand.vmem [shape: bf16[32,128], index: 3, kind: input, shape index: {}]
  %s4 = inlined_call_operand.vmem [shape: f32[1,128], index: 4, kind: input, shape index: {}]
  %s5 = inlined_call_operand.vmem [shape: bf16[128,2], index: 5, kind: input, shape index: {}]
  %s6 = inlined_call_operand.vmem [shape: f32[1,2], index: 6, kind: input, shape index: {}]
  %s7 = inlined_call_operand.vmem [shape: f32[2,8,2], index: 7, kind: output, shape index: {}]
  %s8 = sld [smem:[#allocation0]]
  $region61: #{tpu_custom_call.1} parent=0
    _
  %s10 = ssub.s32 1, %s8
  %s11 = scalar_select 0, %s10, %s8
  loop: start=0, step=1, limit=4
  $region2: #{tpu_custom_call.1} parent=0 // loop_pre_header
    _
  $region3: #{tpu_custom_call.1} parent=0 // loop_header
    %s13 = sphi 0, %s17
    %p14 = scmp.ge.s32.totalorder %s13, 4
    %s20 = sphi 0, %s32
    %s21 = sphi 0, %s28
    %s22 = sphi 0, %s20
    %s23 = sphi 0, %s21
    %s24 = sphi 0, %s22
    %s25 = sphi 0, %s23
    %s35 = sphi 0, %s37
    %s38 = sphi 0, %s35
    %s39 = sphi 0, %s38
    %s55 = sphi 0, %s39
    %s63 = sphi 0, %s65
    %s66 = sphi 0, %s63
    %s67 = sphi 0, %s66
    %s83 = sphi 0, %s67
    %s87 = sphi 0, %s87
    %s89 = sphi 0, %s87
    %s90 = sphi 0, %s89
    %s104 = sphi 0, %s90
    %s108 = sphi 0, %s108
    %s110 = sphi 0, %s108
    %s111 = sphi 0, %s110
    %s125 = sphi 0, %s111
    %s129 = sphi 0, %s129
    %s131 = sphi 0, %s129
    %s132 = sphi 0, %s131
    %s146 = sphi 0, %s132
    %s150 = sphi 0, %s150
    %s152 = sphi 0, %s150
    %s153 = sphi 0, %s152
    %s167 = sphi 0, %s153
    %s171 = sphi 0, %s171
    %s173 = sphi 0, %s171
    %s174 = sphi 0, %s173
    %s188 = sphi 0, %s174
    %s196 = sphi 0, %s198
    %s199 = sphi 0, %s196
    %s200 = sphi 0, %s199
    %s216 = sphi 0, %s200
  $region4: #{tpu_custom_call.1} parent=0 // loop_header_branch
    %16 = sbr.rel (%p14) target = $region8
  $region5: #{tpu_custom_call.1} parent=0 // loop_body
    %s18 = ssub.s32 %s13, 1
    %s19 = ssub.s32 %s13, 2
    %s26 = sadd.s32 1, %s21
    %p27 = scmp.ge.s32.totalorder %s26, 1
    %s28 = scalar_select %p27, 0, %s26
    %s29 = sadd.s32 1, %s20
    %s30 = scalar_select %p27, %s29, %s20
    %p31 = scmp.ge.s32.totalorder %s30, 2
    %s32 = scalar_select %p31, 0, %s30
    %s33 = ssub.s32 %s20, %s32
    %p34 = scmp.eq.s32.totalorder %s33, 0
    %s36 = sadd.s32 %s35, 1
    %s37 = scalar_select %p34, %s35, %s36
    %p40 = pneg %p34
    %p41 = scmp.eq.s32.totalorder %s13, 1
    %p42 = por %p40, %p41
    %p43 = scmp.ne.s32.totalorder %s35, %s38
    %p44 = scmp.eq.s32.totalorder %s13, 0
    %p45 = por %p43, %p44
    %p46 = scmp.ne.s32.totalorder %s35, %s38
    %p47 = scmp.eq.s32.totalorder %s18, 1
    %p48 = por %p46, %p47
    %p49 = scmp.ne.s32.totalorder %s38, %s39
    %p50 = scmp.eq.s32.totalorder %s18, 0
    %p51 = por %p49, %p50
    %p52 = scmp.ne.s32.totalorder %s38, %s39
    %p53 = scmp.eq.s32.totalorder %s19, 1
    %p54 = por %p52, %p53
    %p56 = scmp.ne.s32.totalorder %s39, %s55
    %p57 = scmp.eq.s32.totalorder %s19, 0
    %p58 = por %p56, %p57
    %s59 = ssub.s32 %s20, %s32
    %s60 = ssub.s32 %s21, %s28
    %s61 = sor.u32 %s59, %s60
    %p62 = scmp.eq.s32.totalorder %s61, 0
    %s64 = sadd.s32 %s63, 1
    %s65 = scalar_select %p62, %s63, %s64
    %p68 = pneg %p62
    %p69 = scmp.eq.s32.totalorder %s13, 1
    %p70 = por %p68, %p69
    %p71 = scmp.ne.s32.totalorder %s63, %s66
    %p72 = scmp.eq.s32.totalorder %s13, 0
    %p73 = por %p71, %p72
    %p74 = scmp.ne.s32.totalorder %s63, %s66
    %p75 = scmp.eq.s32.totalorder %s18, 1
    %p76 = por %p74, %p75
    %p77 = scmp.ne.s32.totalorder %s66, %s67
    %p78 = scmp.eq.s32.totalorder %s18, 0
    %p79 = por %p77, %p78
    %p80 = scmp.ne.s32.totalorder %s66, %s67
    %p81 = scmp.eq.s32.totalorder %s19, 1
    %p82 = por %p80, %p81
    %p84 = scmp.ne.s32.totalorder %s67, %s83
    %p85 = scmp.eq.s32.totalorder %s19, 0
    %p86 = por %p84, %p85
    %s88 = sadd.s32 %s87, 1
    %p91 = scmp.eq.s32.totalorder %s13, 1
    %p92 = scmp.ne.s32.totalorder %s87, %s89
    %p93 = scmp.eq.s32.totalorder %s13, 0
    %p94 = por %p92, %p93
    %p95 = scmp.ne.s32.totalorder %s87, %s89
    %p96 = scmp.eq.s32.totalorder %s18, 1
    %p97 = por %p95, %p96
    %p98 = scmp.ne.s32.totalorder %s89, %s90
    %p99 = scmp.eq.s32.totalorder %s18, 0
    %p100 = por %p98, %p99
    %p101 = scmp.ne.s32.totalorder %s89, %s90
    %p102 = scmp.eq.s32.totalorder %s19, 1
    %p103 = por %p101, %p102
    %p105 = scmp.ne.s32.totalorder %s90, %s104
    %p106 = scmp.eq.s32.totalorder %s19, 0
    %p107 = por %p105, %p106
    %s109 = sadd.s32 %s108, 1
    %p112 = scmp.eq.s32.totalorder %s13, 1
    %p113 = scmp.ne.s32.totalorder %s108, %s110
    %p114 = scmp.eq.s32.totalorder %s13, 0
    %p115 = por %p113, %p114
    %p116 = scmp.ne.s32.totalorder %s108, %s110
    %p117 = scmp.eq.s32.totalorder %s18, 1
    %p118 = por %p116, %p117
    %p119 = scmp.ne.s32.totalorder %s110, %s111
    %p120 = scmp.eq.s32.totalorder %s18, 0
    %p121 = por %p119, %p120
    %p122 = scmp.ne.s32.totalorder %s110, %s111
    %p123 = scmp.eq.s32.totalorder %s19, 1
    %p124 = por %p122, %p123
    %p126 = scmp.ne.s32.totalorder %s111, %s125
    %p127 = scmp.eq.s32.totalorder %s19, 0
    %p128 = por %p126, %p127
    %s130 = sadd.s32 %s129, 1
    %p133 = scmp.eq.s32.totalorder %s13, 1
    %p134 = scmp.ne.s32.totalorder %s129, %s131
    %p135 = scmp.eq.s32.totalorder %s13, 0
    %p136 = por %p134, %p135
    %p137 = scmp.ne.s32.totalorder %s129, %s131
    %p138 = scmp.eq.s32.totalorder %s18, 1
    %p139 = por %p137, %p138
    %p140 = scmp.ne.s32.totalorder %s131, %s132
    %p141 = scmp.eq.s32.totalorder %s18, 0
    %p142 = por %p140, %p141
    %p143 = scmp.ne.s32.totalorder %s131, %s132
    %p144 = scmp.eq.s32.totalorder %s19, 1
    %p145 = por %p143, %p144
    %p147 = scmp.ne.s32.totalorder %s132, %s146
    %p148 = scmp.eq.s32.totalorder %s19, 0
    %p149 = por %p147, %p148
    %s151 = sadd.s32 %s150, 1
    %p154 = scmp.eq.s32.totalorder %s13, 1
    %p155 = scmp.ne.s32.totalorder %s150, %s152
    %p156 = scmp.eq.s32.totalorder %s13, 0
    %p157 = por %p155, %p156
    %p158 = scmp.ne.s32.totalorder %s150, %s152
    %p159 = scmp.eq.s32.totalorder %s18, 1
    %p160 = por %p158, %p159
    %p161 = scmp.ne.s32.totalorder %s152, %s153
    %p162 = scmp.eq.s32.totalorder %s18, 0
    %p163 = por %p161, %p162
    %p164 = scmp.ne.s32.totalorder %s152, %s153
    %p165 = scmp.eq.s32.totalorder %s19, 1
    %p166 = por %p164, %p165
    %p168 = scmp.ne.s32.totalorder %s153, %s167
    %p169 = scmp.eq.s32.totalorder %s19, 0
    %p170 = por %p168, %p169
    %s172 = sadd.s32 %s171, 1
    %p175 = scmp.eq.s32.totalorder %s13, 1
    %p176 = scmp.ne.s32.totalorder %s171, %s173
    %p177 = scmp.eq.s32.totalorder %s13, 0
    %p178 = por %p176, %p177
    %p179 = scmp.ne.s32.totalorder %s171, %s173
    %p180 = scmp.eq.s32.totalorder %s18, 1
    %p181 = por %p179, %p180
    %p182 = scmp.ne.s32.totalorder %s173, %s174
    %p183 = scmp.eq.s32.totalorder %s18, 0
    %p184 = por %p182, %p183
    %p185 = scmp.ne.s32.totalorder %s173, %s174
    %p186 = scmp.eq.s32.totalorder %s19, 1
    %p187 = por %p185, %p186
    %p189 = scmp.ne.s32.totalorder %s174, %s188
    %p190 = scmp.eq.s32.totalorder %s19, 0
    %p191 = por %p189, %p190
    %s192 = ssub.s32 %s20, %s32
    %s193 = ssub.s32 %s21, %s28
    %s194 = sor.u32 %s192, %s193
    %p195 = scmp.eq.s32.totalorder %s194, 0
    %s197 = sadd.s32 %s196, 1
    %s198 = scalar_select %p195, %s196, %s197
    %p201 = pneg %p195
    %p202 = scmp.eq.s32.totalorder %s13, 1
    %p203 = por %p201, %p202
    %p204 = scmp.ne.s32.totalorder %s196, %s199
    %p205 = scmp.eq.s32.totalorder %s13, 0
    %p206 = por %p204, %p205
    %p207 = scmp.ne.s32.totalorder %s196, %s199
    %p208 = scmp.eq.s32.totalorder %s18, 1
    %p209 = por %p207, %p208
    %p210 = scmp.ne.s32.totalorder %s199, %s200
    %p211 = scmp.eq.s32.totalorder %s18, 0
    %p212 = por %p210, %p211
    %p213 = scmp.ne.s32.totalorder %s199, %s200
    %p214 = scmp.eq.s32.totalorder %s19, 1
    %p215 = por %p213, %p214
    %p217 = scmp.ne.s32.totalorder %s200, %s216
    %p218 = scmp.eq.s32.totalorder %s19, 0
    %p219 = por %p217, %p218
    %p220 = scmp.le.s32.totalorder 1, %s13
    %p221 = scmp.lt.s32.totalorder %s13, 3
    %p222 = pnand %p220, %p221
    %p223 = pneg %p222
    // Predicated region
    $region9: #{tpu_custom_call.1} parent=5 // pred_check
      _
    $region10: #{tpu_custom_call.1} parent=5 // pred_check_branch
      %225 = sbr.rel (%p222) target = $region12
    $region11: #{tpu_custom_call.1} parent=5 // pred_region
      %s226 = ssub.s32 %s13, 1
      // Predicated region
      $region13: #{tpu_custom_call.1} parent=11 // pred_check
        %p227 = pneg %p100
      $region14: #{tpu_custom_call.1} parent=11 // pred_check_branch
        %229 = sbr.rel (%p227) target = $region16
      $region15: #{tpu_custom_call.1} parent=11 // pred_region
        _
      $region16: #{tpu_custom_call.1} parent=11 // pred_fallthru
        _
      // Predicated region
      $region17: #{tpu_custom_call.1} parent=11 // pred_check
        %p230 = pneg %p121
      $region18: #{tpu_custom_call.1} parent=11 // pred_check_branch
        %232 = sbr.rel (%p230) target = $region20
      $region19: #{tpu_custom_call.1} parent=11 // pred_region
        _
      $region20: #{tpu_custom_call.1} parent=11 // pred_fallthru
        _
      // Predicated region
      $region21: #{tpu_custom_call.1} parent=11 // pred_check
        %p233 = pneg %p142
      $region22: #{tpu_custom_call.1} parent=11 // pred_check_branch
        %235 = sbr.rel (%p233) target = $region24
      $region23: #{tpu_custom_call.1} parent=11 // pred_region
        _
      $region24: #{tpu_custom_call.1} parent=11 // pred_fallthru
        _
      // Predicated region
      $region25: #{tpu_custom_call.1} parent=11 // pred_check
        %p236 = pneg %p163
      $region26: #{tpu_custom_call.1} parent=11 // pred_check_branch
        %238 = sbr.rel (%p236) target = $region28
      $region27: #{tpu_custom_call.1} parent=11 // pred_region
        _
      $region28: #{tpu_custom_call.1} parent=11 // pred_fallthru
        _
      // Predicated region
      $region29: #{tpu_custom_call.1} parent=11 // pred_check
        %p239 = pneg %p184
      $region30: #{tpu_custom_call.1} parent=11 // pred_check_branch
        %241 = sbr.rel (%p239) target = $region32
      $region31: #{tpu_custom_call.1} parent=11 // pred_region
        _
      $region32: #{tpu_custom_call.1} parent=11 // pred_fallthru
        _
    $region12: #{tpu_custom_call.1} parent=5 // pred_fallthru
      _
    %p242 = scmp.lt.s32.totalorder %s13, 2
    // Predicated region
    $region33: #{tpu_custom_call.1} parent=5 // pred_check
      %p243 = pneg %p242
    $region34: #{tpu_custom_call.1} parent=5 // pred_check_branch
      %245 = sbr.rel (%p243) target = $region36
    $region35: #{tpu_custom_call.1} parent=5 // pred_region
      // Predicated region
      $region37: #{tpu_custom_call.1} parent=35 // pred_check
        %p246 = pneg %p45
      $region38: #{tpu_custom_call.1} parent=35 // pred_check_branch
        %248 = sbr.rel (%p246) target = $region40
      $region39: #{tpu_custom_call.1} parent=35 // pred_region
        %p249 = scmp.lt.s32.totalorder %s20, 1
        %s250 = scalar_select %p249, %s20, 1
        %s251 = scalar_lea.vmem %s0, %s250
      $region40: #{tpu_custom_call.1} parent=35 // pred_fallthru
        _
      // Predicated region
      $region41: #{tpu_custom_call.1} parent=35 // pred_check
        %p252 = pneg %p73
      $region42: #{tpu_custom_call.1} parent=35 // pred_check_branch
        %254 = sbr.rel (%p252) target = $region44
      $region43: #{tpu_custom_call.1} parent=35 // pred_region
        %p255 = scmp.lt.s32.totalorder %s20, 1
        %s256 = scalar_select %p255, %s20, 1
        %p257 = scmp.lt.s32.totalorder %s21, 0
        %s258 = scalar_select %p257, %s21, 0
        %s259 = sadd.s32 %s258, %s256
        %s260 = smul.addr %s259, 8
        %s261 = scalar_lea.vmem %s1, %s260
      $region44: #{tpu_custom_call.1} parent=35 // pred_fallthru
        _
    $region36: #{tpu_custom_call.1} parent=5 // pred_fallthru
      _
    %p262 = scmp.le.s32.totalorder 1, %s13
    %p263 = scmp.lt.s32.totalorder %s13, 3
    %p264 = pnand %p262, %p263
    %p265 = pneg %p264
    // Predicated region
    $region45: #{tpu_custom_call.1} parent=5 // pred_check
      _
    $region46: #{tpu_custom_call.1} parent=5 // pred_check_branch
      %267 = sbr.rel (%p264) target = $region48
    $region47: #{tpu_custom_call.1} parent=5 // pred_region
      %s268 = ssub.s32 %s13, 1
      %p269 = scmp.lt.s32.totalorder %s22, 1
      %s270 = scalar_select %p269, %s22, 1
      %s271 = scalar_lea.vmem %s0, %s270
      %p272 = pneg %p51
      %p273 = pneg %p48
      %p274 = scmp.lt.s32.totalorder %s22, 1
      %s275 = scalar_select %p274, %s22, 1
      %p276 = scmp.lt.s32.totalorder %s23, 0
      %s277 = scalar_select %p276, %s23, 0
      %s278 = sadd.s32 %s277, %s275
      %s279 = smul.addr %s278, 8
      %s280 = scalar_lea.vmem %s1, %s279
      %p281 = pneg %p79
      %p282 = pneg %p76
      %p283 = pneg %p100
      %p284 = pneg %p97
      %p285 = pneg %p121
      %p286 = pneg %p118
      %p287 = pneg %p142
      %p288 = pneg %p139
      %p289 = pneg %p163
      %p290 = pneg %p160
      %p291 = pneg %p184
      %p292 = pneg %p181
      %p293 = pneg %p212
      %p294 = pneg %p209
      %p295 = scmp.lt.s32.totalorder %s22, 1
      %s296 = scalar_select %p295, %s22, 1
      %p297 = scmp.lt.s32.totalorder %s23, 0
      %s298 = scalar_select %p297, %s23, 0
      %s299 = sadd.s32 %s298, %s296
      %s300 = smul.addr %s299, 8
      %s301 = scalar_lea.vmem %s7, %s300
      %p302 = scmp.lt.s32.totalorder %s22, 1
      %s303 = scalar_select %p302, %s22, 1
      %s304 = scalar_lea.vmem %s0, %s303
      %p305 = scmp.lt.s32.totalorder %s22, 1
      %s306 = scalar_select %p305, %s22, 1
      %p307 = scmp.lt.s32.totalorder %s23, 0
      %s308 = scalar_select %p307, %s23, 0
      %s309 = sadd.s32 %s308, %s306
      %s310 = smul.addr %s309, 8
      %s311 = scalar_lea.vmem %s1, %s310
      %p312 = scmp.lt.s32.totalorder %s22, 1
      %s313 = scalar_select %p312, %s22, 1
      %p314 = scmp.lt.s32.totalorder %s23, 0
      %s315 = scalar_select %p314, %s23, 0
      %s316 = sadd.s32 %s315, %s313
      %s317 = smul.addr %s316, 8
      %s318 = scalar_lea.vmem %s7, %s317
      %v320 = vld [vmem:[%s304] sm:$0x1]
      %v321 = vpack.c.bf16 %v320, %v320
      %v322 = vld [vmem:[%s2] sm:$0xf]
      %v323 = vld [vmem:[%s2 + $0x4] sm:$0xf]
      %v324 = vld [vmem:[%s2 + $0x8] sm:$0xf]
      %v325 = vld [vmem:[%s2 + $0xc] sm:$0xf]
      %v330 = vunpack.c.l.b16 %v322
      %v331 = vunpack.c.l.b16 %v323
      %v332 = vunpack.c.l.b16 %v324
      %v333 = vunpack.c.l.b16 %v325
      %v334 = vpack.c.b16 %v331, %v330
      %v335 = vpack.c.b16 %v333, %v332
      %vm338 = vcmask 261120
      %v340 = vsel %vm338, %v321, 0
      %342 = vmatprep.subr.bf16.mxu0 0
      %343 = vmatpush1.bf16.msra.mxu0 %v334
      %344 = vmatprep.subr.bf16.mxu0 0
      %345 = vmatpush1.bf16.msra.mxu0 %v335
      %346 = vmatprep.subr.bf16.mxu0 0
      %347 = vmatpush1.bf16.msra.mxu0 0
      %348 = vmatprep.subr.bf16.mxu0 0
      %349 = vmatpush1.bf16.msra.mxu0 0
      %350 = vmatprep.subr.bf16.mxu0 0
      %351 = vmatpush1.bf16.msra.mxu0 0
      %352 = vmatprep.subr.bf16.mxu0 0
      %353 = vmatpush1.bf16.msra.mxu0 0
      %354 = vmatprep.subr.bf16.mxu0 0
      %355 = vmatpush1.bf16.msra.mxu0 0
      %356 = vmatprep.subr.bf16.mxu0 0
      %357 = vmatpush1.bf16.msra.mxu0 0
      %358 = vmatprep.subr.bf16.mxu0 0
      %359 = vmatpush1.bf16.msra.mxu0 0
      %360 = vmatprep.subr.bf16.mxu0 0
      %361 = vmatpush1.bf16.msra.mxu0 0
      %362 = vmatprep.subr.bf16.mxu0 0
      %363 = vmatpush1.bf16.msra.mxu0 0
      %364 = vmatprep.subr.bf16.mxu0 0
      %365 = vmatpush1.bf16.msra.mxu0 0
      %366 = vmatprep.subr.bf16.mxu0 0
      %367 = vmatpush1.bf16.msra.mxu0 0
      %368 = vmatprep.subr.bf16.mxu0 0
      %369 = vmatpush1.bf16.msra.mxu0 0
      %370 = vmatprep.subr.bf16.mxu0 0
      %371 = vmatpush1.bf16.msra.mxu0 0
      %372 = vmatprep.subr.bf16.mxu0 0
      %373 = vmatpush1.bf16.msra.mxu0 0
      %374 = vmatprep.mubr.bf16.mxu0 0
      %375 = vmatmul.mubr.bf16.gmra.mrb[0].mxu0 %v340
      %v376 = vpop.f32.mrb[0].mxu0
      %v377 = vadd.f32 0.0, %v376
      %v378 = vpop.f32.mrb[0].mxu0
      %v379 = vpop.f32.mrb[0].mxu0
      %v380 = vpop.f32.mrb[0].mxu0
      %381 = vdwg.mxu0
      %v382 = vld [vmem:[%s311] sm:$0xff]
      %v383 = vpack.c.bf16 %v382, %v382
      %v384 = vld [vmem:[%s3] sm:$0xf]
      %v385 = vld [vmem:[%s3 + $0x4] sm:$0xf]
      %v386 = vld [vmem:[%s3 + $0x8] sm:$0xf]
      %v387 = vld [vmem:[%s3 + $0xc] sm:$0xf]
      %v388 = vlaneseq
      %v389 = vshrl.u32 %v388, 7
      %v390 = vsub.s32 0, %v389
      %v391 = vrot.slane %v377, %v390
      %v396 = vunpack.c.l.b16 %v384
      %v397 = vunpack.c.l.b16 %v385
      %v398 = vunpack.c.l.b16 %v386
      %v399 = vunpack.c.l.b16 %v387
      %v400 = vpack.c.b16 %v397, %v396
      %v401 = vpack.c.b16 %v399, %v398
      %v405 = vsel %vm338, %v383, 0
      %407 = vmatprep.subr.bf16.mxu0 0
      %408 = vmatpush1.bf16.msra.mxu0 %v400
      %409 = vmatprep.subr.bf16.mxu0 0
      %410 = vmatpush1.bf16.msra.mxu0 %v401
      %411 = vmatprep.subr.bf16.mxu0 0
      %412 = vmatpush1.bf16.msra.mxu0 0
      %413 = vmatprep.subr.bf16.mxu0 0
      %414 = vmatpush1.bf16.msra.mxu0 0
      %415 = vmatprep.subr.bf16.mxu0 0
      %416 = vmatpush1.bf16.msra.mxu0 0
      %417 = vmatprep.subr.bf16.mxu0 0
      %418 = vmatpush1.bf16.msra.mxu0 0
      %419 = vmatprep.subr.bf16.mxu0 0
      %420 = vmatpush1.bf16.msra.mxu0 0
      %421 = vmatprep.subr.bf16.mxu0 0
      %422 = vmatpush1.bf16.msra.mxu0 0
      %423 = vmatprep.subr.bf16.mxu0 0
      %424 = vmatpush1.bf16.msra.mxu0 0
      %425 = vmatprep.subr.bf16.mxu0 0
      %426 = vmatpush1.bf16.msra.mxu0 0
      %427 = vmatprep.subr.bf16.mxu0 0
      %428 = vmatpush1.bf16.msra.mxu0 0
      %429 = vmatprep.subr.bf16.mxu0 0
      %430 = vmatpush1.bf16.msra.mxu0 0
      %431 = vmatprep.subr.bf16.mxu0 0
      %432 = vmatpush1.bf16.msra.mxu0 0
      %433 = vmatprep.subr.bf16.mxu0 0
      %434 = vmatpush1.bf16.msra.mxu0 0
      %435 = vmatprep.subr.bf16.mxu0 0
      %436 = vmatpush1.bf16.msra.mxu0 0
      %437 = vmatprep.subr.bf16.mxu0 0
      %438 = vmatpush1.bf16.msra.mxu0 0
      %439 = vmatprep.mubr.bf16.mxu0 0
      %440 = vmatmul.mubr.bf16.gmra.mrb[0].mxu0 %v405
      %v441 = vpop.f32.mrb[0].mxu0
      %v442 = vadd.f32 %v391, %v441
      %v443 = vpop.f32.mrb[0].mxu0
      %v444 = vpop.f32.mrb[0].mxu0
      %v445 = vpop.f32.mrb[0].mxu0
      %446 = vdwg.mxu0
      %v447 = vld [vmem:[%s4] sm:$0x1]
      %v449 = vlaneseq
      %v450 = vshrl.u32 %v449, 7
      %v451 = vsub.s32 0, %v450
      %v452 = vrot.slane %v447, %v451
      %v454 = vadd.f32 %v442, %v452
      %vm455 = vcmp.gt.f32.partialorder %v454, 0.0
      %v456 = vmul.f32 %v454, 0.01
      %v457 = vsel %vm455, %v454, %v456
      %v458 = vpack.c.bf16 %v457, %v457
      %v459 = vld [vmem:[%s5] sm:$0xf]
      %v460 = vld [vmem:[%s5 + $0x4] sm:$0xf]
      %v461 = vld [vmem:[%s5 + $0x8] sm:$0xf]
      %v462 = vld [vmem:[%s5 + $0xc] sm:$0xf]
      %v463 = vld [vmem:[%s5 + $0x10] sm:$0xf]
      %v464 = vld [vmem:[%s5 + $0x14] sm:$0xf]
      %v465 = vld [vmem:[%s5 + $0x18] sm:$0xf]
      %v466 = vld [vmem:[%s5 + $0x1c] sm:$0xf]
      %v467 = vld [vmem:[%s5 + $0x20] sm:$0xf]
      %v468 = vld [vmem:[%s5 + $0x24] sm:$0xf]
      %v469 = vld [vmem:[%s5 + $0x28] sm:$0xf]
      %v470 = vld [vmem:[%s5 + $0x2c] sm:$0xf]
      %v471 = vld [vmem:[%s5 + $0x30] sm:$0xf]
      %v472 = vld [vmem:[%s5 + $0x34] sm:$0xf]
      %v473 = vld [vmem:[%s5 + $0x38] sm:$0xf]
      %v474 = vld [vmem:[%s5 + $0x3c] sm:$0xf]
      %v475 = vld [vmem:[%s6] sm:$0x1]
      %v477 = vlaneseq
      %v478 = vshrl.u32 %v477, 7
      %v479 = vsub.s32 0, %v478
      %v480 = vrot.slane %v475, %v479
      %v498 = vunpack.c.l.b16 %v459
      %v499 = vunpack.c.l.b16 %v460
      %v500 = vunpack.c.l.b16 %v461
      %v501 = vunpack.c.l.b16 %v462
      %v502 = vunpack.c.l.b16 %v463
      %v503 = vunpack.c.l.b16 %v464
      %v504 = vunpack.c.l.b16 %v465
      %v505 = vunpack.c.l.b16 %v466
      %v506 = vunpack.c.l.b16 %v467
      %v507 = vunpack.c.l.b16 %v468
      %v508 = vunpack.c.l.b16 %v469
      %v509 = vunpack.c.l.b16 %v470
      %v510 = vunpack.c.l.b16 %v471
      %v511 = vunpack.c.l.b16 %v472
      %v512 = vunpack.c.l.b16 %v473
      %v513 = vunpack.c.l.b16 %v474
      %v514 = vpack.c.b16 %v499, %v498
      %v515 = vpack.c.b16 %v501, %v500
      %v516 = vpack.c.b16 %v503, %v502
      %v517 = vpack.c.b16 %v505, %v504
      %v518 = vpack.c.b16 %v507, %v506
      %v519 = vpack.c.b16 %v509, %v508
      %v520 = vpack.c.b16 %v511, %v510
      %v521 = vpack.c.b16 %v513, %v512
      %530 = vmatprep.subr.bf16.mxu0 0
      %531 = vmatpush1.bf16.msra.mxu0 %v514
      %532 = vmatprep.subr.bf16.mxu0 0
      %533 = vmatpush1.bf16.msra.mxu0 %v515
      %534 = vmatprep.subr.bf16.mxu0 0
      %535 = vmatpush1.bf16.msra.mxu0 %v516
      %536 = vmatprep.subr.bf16.mxu0 0
      %537 = vmatpush1.bf16.msra.mxu0 %v517
      %538 = vmatprep.subr.bf16.mxu0 0
      %539 = vmatpush1.bf16.msra.mxu0 %v518
      %540 = vmatprep.subr.bf16.mxu0 0
      %541 = vmatpush1.bf16.msra.mxu0 %v519
      %542 = vmatprep.subr.bf16.mxu0 0
      %543 = vmatpush1.bf16.msra.mxu0 %v520
      %544 = vmatprep.subr.bf16.mxu0 0
      %545 = vmatpush1.bf16.msra.mxu0 %v521
      %546 = vmatprep.subr.bf16.mxu0 0
      %547 = vmatpush1.bf16.msra.mxu0 0
      %548 = vmatprep.subr.bf16.mxu0 0
      %549 = vmatpush1.bf16.msra.mxu0 0
      %550 = vmatprep.subr.bf16.mxu0 0
      %551 = vmatpush1.bf16.msra.mxu0 0
      %552 = vmatprep.subr.bf16.mxu0 0
      %553 = vmatpush1.bf16.msra.mxu0 0
      %554 = vmatprep.subr.bf16.mxu0 0
      %555 = vmatpush1.bf16.msra.mxu0 0
      %556 = vmatprep.subr.bf16.mxu0 0
      %557 = vmatpush1.bf16.msra.mxu0 0
      %558 = vmatprep.subr.bf16.mxu0 0
      %559 = vmatpush1.bf16.msra.mxu0 0
      %560 = vmatprep.subr.bf16.mxu0 0
      %561 = vmatpush1.bf16.msra.mxu0 0
      %562 = vmatprep.mubr.bf16.mxu0 0
      %563 = vmatmul.mubr.bf16.gmra.mrb[0].mxu0 %v458
      %v564 = vpop.f32.mrb[0].mxu0
      %v565 = vadd.f32 %v480, %v564
      %v566 = vpop.f32.mrb[0].mxu0
      %v567 = vpop.f32.mrb[0].mxu0
      %v568 = vpop.f32.mrb[0].mxu0
      %569 = vdwg.mxu0
      %v570 = vsub.f32 0.0, %v565
      %v571 = vmul.f32 %v570, 1.442695
      %v572 = vpow.pop %v571
      %v573 = vadd.f32 %v572, 1.0
      %v574 = vrcp.pop %v573
      %vm575 = vcmask 15360
      %576 = vst.msk [vmem:[%s318] sm:$0xff] %vm575, %v574
      %p577 = scmp.lt.s32.totalorder %s22, 1
      %s578 = scalar_select %p577, %s22, 1
      %p579 = scmp.lt.s32.totalorder %s23, 0
      %s580 = scalar_select %p579, %s23, 0
      %s581 = sadd.s32 %s580, %s578
      %s582 = smul.addr %s581, 8
      %s583 = scalar_lea.vmem %s7, %s582
      // Predicated region
      $region49: #{tpu_custom_call.1} parent=47 // pred_check
        %p584 = pneg %p209
      $region50: #{tpu_custom_call.1} parent=47 // pred_check_branch
        %586 = sbr.rel (%p584) target = $region52
      $region51: #{tpu_custom_call.1} parent=47 // pred_region
        _
      $region52: #{tpu_custom_call.1} parent=47 // pred_fallthru
        _
    $region48: #{tpu_custom_call.1} parent=5 // pred_fallthru
      _
    %p587 = scmp.le.s32.totalorder 2, %s13
    // Predicated region
    $region53: #{tpu_custom_call.1} parent=5 // pred_check
      %p588 = pneg %p587
    $region54: #{tpu_custom_call.1} parent=5 // pred_check_branch
      %590 = sbr.rel (%p588) target = $region56
    $region55: #{tpu_custom_call.1} parent=5 // pred_region
      %s591 = ssub.s32 %s13, 2
      // Predicated region
      $region57: #{tpu_custom_call.1} parent=55 // pred_check
        %p592 = pneg %p215
      $region58: #{tpu_custom_call.1} parent=55 // pred_check_branch
        %594 = sbr.rel (%p592) target = $region60
      $region59: #{tpu_custom_call.1} parent=55 // pred_region
        %p595 = scmp.lt.s32.totalorder %s24, 1
        %s596 = scalar_select %p595, %s24, 1
        %p597 = scmp.lt.s32.totalorder %s25, 0
        %s598 = scalar_select %p597, %s25, 0
        %s599 = sadd.s32 %s598, %s596
        %s600 = smul.addr %s599, 8
        %s601 = scalar_lea.vmem %s7, %s600
      $region60: #{tpu_custom_call.1} parent=55 // pred_fallthru
        _
    $region56: #{tpu_custom_call.1} parent=5 // pred_fallthru
      _
  $region6: #{tpu_custom_call.1} parent=0 // loop_footer
    %s17 = sadd.s32 1, %s13
  $region7: #{tpu_custom_call.1} parent=0 // loop_footer_branch
    %12 = sbr.rel target = $region3
  $region8: #{tpu_custom_call.1} parent=0 // loop_exit
    _

</llo_original>
